<compile_context>
chip_gen: v5e
topology: v5e:2x2
jax: 0.10.0
libtpu: 0.0.40
codegen_flags: <defaults>
</compile_context>

<pallas_src>
import functools

import jax
import jax.numpy as jnp
from jax.experimental import pallas as pl
from jax.experimental.pallas import tpu as pltpu


def _normalization_kernel(x_ref, stats_ref, out_ref, *, block_rows):
    """out = x * scale + bias  ==  (x - mean) / std.

    x_ref / out_ref : (bR, bL) tile of the flattened (N*C, H*W) image.
    stats_ref       : (R, 2) resident float32 table; col 0 = 1/std, col 1 = -mean/std.
    """
    row0 = pl.multiple_of(pl.program_id(0) * block_rows, block_rows)
    stats = stats_ref[pl.ds(row0, block_rows), :]        # (bR, 2) float32
    scale = stats[:, 0:1]                                # (bR, 1) -> lane broadcast
    bias = stats[:, 1:2]                                 # (bR, 1)
    x = x_ref[...].astype(jnp.float32)
    out_ref[...] = (x * scale + bias).astype(out_ref.dtype)


def _largest_aligned_divisor(extent, align, cap):
    """Largest b with b % align == 0, extent % b == 0 and b <= max(cap, align).

    Falls back to the full extent (always a legal TPU block dim) if no aligned
    divisor exists (e.g. extent < align or extent not divisible by align)."""
    best = None
    b = align
    limit = min(extent, max(cap, align))
    while b <= limit:
        if extent % b == 0:
            best = b
        b += align
    return best if best is not None else extent


def _tpu_tuning():
    """Return (target_block_bytes, vmem_limit_bytes or None) for this TPU gen."""
    kind = ""
    try:
        kind = jax.devices()[0].device_kind.lower()
    except Exception:
        pass
    if "v7" in kind:
        # 3.2 TB/s HBM: the ~0.35us/step overhead is ~25-30% at 2 MiB tiles.
        # 6 MiB tiles -> 4 x 6 MiB = 24 MiB double-buffered, raise scoped VMEM.
        return 6 << 20, 48 << 20
    if "v6" in kind:
        # 4 x 4 MiB = 16 MiB < 32 MiB default scoped VMEM; no flag needed.
        return 4 << 20, None
    # v5e (16 MiB default scoped VMEM) / unknown: stay conservative.
    return 2 << 20, None


def normalization(img, mean, std, *, target_block_bytes=None, vmem_limit_bytes=None):
    """(img - mean.view(-1,1,1)) / std.view(-1,1,1) for an NCHW image batch."""
    N, C, H, W = img.shape
    assert mean.shape == (C,) and std.shape == (C,)

    if target_block_bytes is None:
        target_block_bytes, auto_vmem = _tpu_tuning()
        if vmem_limit_bytes is None:
            vmem_limit_bytes = auto_vmem

    R, L = N * C, H * W
    itemsize = jnp.dtype(img.dtype).itemsize

    # Layout plumbing outside the kernel: lane-dense 2D view, row = n*C + c.
    x2d = img.reshape(R, L)

    # Per-row float32 (scale, bias) table: out = x * (1/std) + (-mean/std).
    scale = (1.0 / std.astype(jnp.float32))                       # (C,)
    bias = -mean.astype(jnp.float32) * scale                      # (C,)
    stats = jnp.tile(jnp.stack([scale, bias], axis=-1), (N, 1))   # (R, 2) f32

    # Lane-dense tiling: last block dim a multiple of 128 (or full extent),
    # second-to-last aligned to the dtype-aware sublane packing (8/16/32).
    # NOTE: if H*W is small or not a multiple of 128 (e.g. 7x7=49) we fall back
    # to the full lane extent -> masked vst.msk stores and lane padding; pad
    # H*W to a 128 multiple upstream if that case matters for performance.
    sublane_align = 8 * max(1, 4 // itemsize)
    lane_cap = max(128, target_block_bytes // (sublane_align * itemsize))
    bL = _largest_aligned_divisor(L, 128, lane_cap)
    row_cap = max(sublane_align, target_block_bytes // (bL * itemsize))
    bR = _largest_aligned_divisor(R, sublane_align, row_cap)

    # Give megacore (v7x: 2 TensorCores) at least 2 steps on the leading
    # parallel axis when all rows would otherwise fit in a single block.
    if R // bR < 2:
        split = _largest_aligned_divisor(R, sublane_align, R // 2)
        if split < R and R % split == 0:
            bR = split

    grid = (R // bR, L // bL)

    compiler_kwargs = dict(dimension_semantics=("parallel", "parallel"))
    if vmem_limit_bytes is not None:
        compiler_kwargs["vmem_limit_bytes"] = vmem_limit_bytes

    out2d = pl.pallas_call(
        functools.partial(_normalization_kernel, block_rows=bR),
        out_shape=jax.ShapeDtypeStruct((R, L), img.dtype),
        grid=grid,
        in_specs=[
            pl.BlockSpec((bR, bL), lambda i, j: (i, j)),   # streamed image tile
            pl.BlockSpec((R, 2), lambda i, j: (0, 0)),     # resident stat table (one DMA)
        ],
        out_specs=pl.BlockSpec((bR, bL), lambda i, j: (i, j)),
        compiler_params=pltpu.CompilerParams(**compiler_kwargs),
    )(x2d, stats)

    return out2d.reshape(N, C, H, W)


if __name__ == "__main__":
    key = jax.random.PRNGKey(0)
    N, C, H, W = 2, 4, 16, 16

    k_img, k_mean, k_std = jax.random.split(key, 3)
    img = jax.random.uniform(k_img, (N, C, H, W), dtype=jnp.float32)
    # Deterministic per-channel statistics (analog of ImageNet mean/std buffers).
    mean = jax.random.uniform(k_mean, (C,), dtype=jnp.float32, minval=0.3, maxval=0.6)
    std = jax.random.uniform(k_std, (C,), dtype=jnp.float32, minval=0.2, maxval=0.3)

    out = normalization(img, mean, std)
    out = jax.block_until_ready(out)

    # Reference in plain JAX (same broadcast semantics as torch's view(-1,1,1)).
    ref = (img - mean[None, :, None, None]) / std[None, :, None, None]
    assert out.shape == (N, C, H, W)
    # Kernel uses the FMA form x*(1/std) + (-mean/std); difference vs an exact
    # divide is a few ulps, covered by the slightly relaxed tolerances.
    assert jnp.allclose(out, ref, atol=2e-6, rtol=1e-5)

    print("KERNEL_OK")
</pallas_src>

<mosaic_0001>
module attributes {stable_mosaic.version = 11 : i64} {
  func.func @_normalization_kernel(%arg0: i32, %arg1: i32, %arg2: memref<8x256xf32, #tpu.memory_space<vmem>>, %arg3: memref<8x2xf32, #tpu.memory_space<vmem>>, %arg4: memref<8x256xf32, #tpu.memory_space<vmem>>) attributes {dimension_semantics = [#tpu.dimension_semantics<parallel>, #tpu.dimension_semantics<parallel>], iteration_bounds = array<i64: 1, 1>, scalar_prefetch = 0 : i64, scratch_operands = 0 : i64, tpu.core_type = #tpu.core_type<tc>, window_params = [{transform_indices = @transform_0, window_bounds = array<i64: 8, 256>}, {pipeline_mode = #tpu.pipeline_mode<synchronous>, transform_indices = @transform_1, window_bounds = array<i64: 8, 2>}, {transform_indices = @transform_2, window_bounds = array<i64: 8, 256>}]} {
    %c8_i32 = arith.constant 8 : i32
    %0 = arith.muli %arg0, %c8_i32 : i32
    %1 = tpu.assume_multiple %0, 8 : i32
    %2 = arith.index_cast %1 : i32 to index
    %c0 = arith.constant 0 : index
    %3 = vector.load %arg3[%2, %c0] : memref<8x2xf32, #tpu.memory_space<vmem>>, vector<8x2xf32>
    %4 = vector.extract_strided_slice %3 {offsets = [0, 0], sizes = [8, 1], strides = [1, 1]} : vector<8x2xf32> to vector<8x1xf32>
    %5 = vector.extract_strided_slice %3 {offsets = [0, 1], sizes = [8, 1], strides = [1, 1]} : vector<8x2xf32> to vector<8x1xf32>
    %c0_0 = arith.constant 0 : index
    %c0_1 = arith.constant 0 : index
    %6 = vector.load %arg2[%c0_0, %c0_1] : memref<8x256xf32, #tpu.memory_space<vmem>>, vector<8x256xf32>
    %7 = vector.broadcast %4 : vector<8x1xf32> to vector<8x256xf32>
    %8 = arith.mulf %6, %7 : vector<8x256xf32>
    %9 = vector.broadcast %5 : vector<8x1xf32> to vector<8x256xf32>
    %10 = arith.addf %8, %9 : vector<8x256xf32>
    %c0_2 = arith.constant 0 : index
    %c0_3 = arith.constant 0 : index
    %11 = vector.load %arg4[%c0_2, %c0_3] : memref<8x256xf32, #tpu.memory_space<vmem>>, vector<8x256xf32>
    tpu.vector_store %arg4[%c0_2, %c0_3], %10 {strides = array<i32>} : memref<8x256xf32, #tpu.memory_space<vmem>>, vector<8x256xf32>,
    return
  }
  func.func @transform_0(%arg0: i32, %arg1: i32) -> (i32, i32) {
    %c0_i32 = arith.constant 0 : i32
    return %arg0, %arg1 : i32, i32
  }
  func.func @transform_1(%arg0: i32, %arg1: i32) -> (i32, i32) {
    %c0_i32 = arith.constant 0 : i32
    %c0_i32_0 = arith.constant 0 : i32
    %c0_i32_1 = arith.constant 0 : i32
    return %c0_i32, %c0_i32_0 : i32, i32
  }
  func.func @transform_2(%arg0: i32, %arg1: i32) -> (i32, i32) {
    %c0_i32 = arith.constant 0 : i32
    return %arg0, %arg1 : i32, i32
  }
}

</mosaic_0001>

<llo_original>
// kernel: tpu_custom_call.1
$region0: #{tpu_custom_call.1}
  #allocation0 [shape = 'u32[]', space=smem, size = 0x4, offset = 0x4, fixed_abs, tag = 'smem constant byte address 0x4 - core index']
  #allocation1 [shape = 'u32[72,128]{1,0:T(1,128)}', space=vmem, size = 0x9000, scoped, tag = 'internal scratch']
  %s0 = inlined_call_operand.hbm [shape: f32[8,256], index: 0, kind: input, shape index: {}]
  %s1 = inlined_call_operand.vmem [shape: f32[8,2], index: 1, kind: input, shape index: {}]
  %s2 = inlined_call_operand.hbm [shape: f32[8,256], index: 2, kind: output, shape index: {}]
  %s3 = sld [smem:[#allocation0]]
  $region22: #{tpu_custom_call.1} parent=0
    _
  %s5 = ssub.s32 1, %s3
  %s6 = scalar_select 0, %s5, %s3
  $region1: #{tpu_custom_call.1} parent=0
    #allocation2 [shape = 'u8[8192]{0}', space=vmem, size = 0x2000, scoped, tag = 'input window, operand 0, single buffered']
    #allocation3 [shape = 's32[1]{0}', space=sflag, size = 0x4, scoped, tag = 'scoped memory for tpu_custom_call.1']
    #allocation4 [shape = 's32[1]{0}', space=sflag, size = 0x4, scoped, tag = 'scoped memory for tpu_custom_call.1']
    #allocation5 [shape = 'u8[8192]{0}', space=vmem, size = 0x2000, scoped, tag = 'output window, operand 0, single buffered']
    %7 = vsyncpa [#allocation3], 0
    %8 = vsyncpa [#allocation4], 0
    // Predicated region
    $region2: #{tpu_custom_call.1} parent=1 // pred_check
      _
    $region3: #{tpu_custom_call.1} parent=1 // pred_check_branch
      %10 = sbr.rel (0) target = $region5
    $region4: #{tpu_custom_call.1} parent=1 // pred_region
      %12 = vsyncadd [#allocation3], 0
      %s14 = sshll.u32 %s0, 4
      %s15 = int_to_ptr.hbm [resolvable:$true] %s14
      %s16 = sshll.u32 [#allocation2], 4
      %s17 = int_to_ptr.vmem [resolvable:$true] %s16
      %19 = dma.hbm_to_vmem [thread:$0]  %s15, 256, %s17, [#allocation3]
    $region5: #{tpu_custom_call.1} parent=1 // pred_fallthru
      _
    // Predicated region
    $region6: #{tpu_custom_call.1} parent=1 // pred_check
      _
    $region7: #{tpu_custom_call.1} parent=1 // pred_check_branch
      %21 = sbr.rel (0) target = $region9
    $region8: #{tpu_custom_call.1} parent=1 // pred_region
      _
    $region9: #{tpu_custom_call.1} parent=1 // pred_fallthru
      _
    // Predicated region
    $region10: #{tpu_custom_call.1} parent=1 // pred_check
      _
    $region11: #{tpu_custom_call.1} parent=1 // pred_check_branch
      %23 = sbr.rel (0) target = $region13
    $region12: #{tpu_custom_call.1} parent=1 // pred_region
      %25 = dma.done [#allocation3], 256
    $region13: #{tpu_custom_call.1} parent=1 // pred_fallthru
      _
    %s26 = smul.u32 0, 8
    %s27 = scalar_lea.vmem %s1, %s26
    %v28 = vld [vmem:[%s27] sm:$0xff]
    %v29 = vld [vmem:[#allocation2] sm:$0xff]
    %v30 = vld [vmem:[#allocation2 + $0x8] sm:$0xff]
    %32 = vset.pattern.permute.xlu0 0
    %33 = vperm.xlu0 %32, %v28
    %v34 = vpop.permute.xlu0 %33
    %v36 = vmul.f32 %v29, %v34
    %v37 = vmul.f32 %v30, %v34
    %38 = vset.pattern.permute.xlu0 1
    %39 = vperm.xlu0 %38, %v28
    %v40 = vpop.permute.xlu0 %39
    %v42 = vadd.f32 %v36, %v40
    %v43 = vadd.f32 %v37, %v40
    %44 = vst [vmem:[#allocation5] sm:$0xff] %v42
    %45 = vst [vmem:[#allocation5 + $0x8] sm:$0xff] %v43
    // Predicated region
    $region14: #{tpu_custom_call.1} parent=1 // pred_check
      _
    $region15: #{tpu_custom_call.1} parent=1 // pred_check_branch
      %47 = sbr.rel (0) target = $region17
    $region16: #{tpu_custom_call.1} parent=1 // pred_region
      %49 = vsyncadd [#allocation4], 0
      %s51 = sshll.u32 [#allocation5], 4
      %s52 = int_to_ptr.vmem [resolvable:$true] %s51
      %s53 = sshll.u32 %s2, 4
      %s54 = int_to_ptr.hbm [resolvable:$true] %s53
      %56 = dma.vmem_to_hbm [thread:$0]  %s52, 256, %s54, [#allocation4]
    $region17: #{tpu_custom_call.1} parent=1 // pred_fallthru
      _
    // Predicated region
    $region18: #{tpu_custom_call.1} parent=1 // pred_check
      _
    $region19: #{tpu_custom_call.1} parent=1 // pred_check_branch
      %58 = sbr.rel (0) target = $region21
    $region20: #{tpu_custom_call.1} parent=1 // pred_region
      %60 = dma.done [#allocation4], 256
    $region21: #{tpu_custom_call.1} parent=1 // pred_fallthru
      _
    %61 = vsyncpa [#allocation3], 1
    %62 = vsyncpa [#allocation4], 1

</llo_original>
